<compile_context>
chip_gen: v6e
topology: v6e:2x2x1
jax: 0.10.0
libtpu: 0.0.40
codegen_flags: <defaults>
</compile_context>

<pallas_src>
import functools
import math

import jax
import jax.numpy as jnp
import numpy as np
from jax.experimental import pallas as pl
from jax.experimental.pallas import tpu as pltpu

_OFFSET = 2  # matches Speech2TextSinusoidalPositionalEmbedding.offset


@functools.lru_cache(maxsize=32)
def _sinusoid_table(num_embeddings: int, embedding_dim: int, padding_idx):
    """numpy port of get_embedding(); cached so the table is built once."""
    # TODO(synk): embedding_dim == 2 divides by zero (half_dim - 1), same as upstream HF.
    half_dim = embedding_dim // 2
    scale = math.log(10000) / (half_dim - 1)
    freqs = np.exp(np.arange(half_dim, dtype=np.float32) * np.float32(-scale))
    emb = np.arange(num_embeddings, dtype=np.float32)[:, None] * freqs[None, :]
    emb = np.concatenate([np.sin(emb), np.cos(emb)], axis=1).astype(np.float32)
    if embedding_dim % 2 == 1:
        emb = np.concatenate([emb, np.zeros((num_embeddings, 1), np.float32)], axis=1)
    if padding_idx is not None:
        emb[padding_idx, :] = 0.0
    return emb


def _table_rows(num_positions, seq_len, padding_idx, past_kv):
    """Table size; grows like the PyTorch module (accounting for past_kv)."""
    num_emb = num_positions + _OFFSET
    max_pos = padding_idx + past_kv + seq_len + 1
    if max_pos > num_emb:
        num_emb = max_pos + _OFFSET
    return num_emb


@functools.lru_cache(maxsize=32)
def _window_blocks(num_positions, seq_len, embedding_dim, padding_idx, past_kv,
                   tile_s, num_blocks):
    """Windowed table viewed as (num_blocks, tile_s, D).

    Window row 0           -> zero (padding) row.
    Window row p (1..S)    -> table[padding_idx + past_kv + p].
    Remaining rows are zero padding (never selected).
    """
    num_emb = _table_rows(num_positions, seq_len, padding_idx, past_kv)
    table = _sinusoid_table(num_emb, embedding_dim, padding_idx)
    win = np.zeros((num_blocks * tile_s, embedding_dim), np.float32)
    start = padding_idx + past_kv + 1
    win[1:seq_len + 1] = table[start:start + seq_len]
    return jnp.asarray(win.reshape(num_blocks, tile_s, embedding_dim))


def _slab_gather_kernel(base_ref, rel_ref, win_lo_ref, win_hi_ref, out_ref):
    """Gather rows of the two streamed slab blocks via exact 0/1 one-hot dots.

    base_ref : (B*S_tiles,) int32 SMEM  scalar prefetch (consumed by index_maps)
    rel_ref  : (1, K, 1) int32          slab-relative row ids: in [0, 2K) for
                                        non-padding tokens, <= 0 for padding
    win_lo   : (1, K, D) f32            window rows [blk*K, (blk+1)*K)
    win_hi   : (1, K, D) f32            window rows [(blk+1)*K, (blk+2)*K)
    out      : (1, K, D) f32
    """
    del base_ref  # only needed by the index_maps
    rel = rel_ref[0]                                         # (K, 1) int32
    k = rel.shape[0]
    lane = jax.lax.broadcasted_iota(jnp.int32, (k, k), 1)
    onehot_lo = (lane == rel).astype(jnp.float32)            # exact 0/1
    onehot_hi = (lane == rel - k).astype(jnp.float32)
    acc = jnp.dot(onehot_lo, win_lo_ref[0], preferred_element_type=jnp.float32)
    acc = acc + jnp.dot(onehot_hi, win_hi_ref[0],
                        preferred_element_type=jnp.float32)
    out_ref[0] = acc.astype(out_ref.dtype)


def speech2text_sinusoidal_positional_embedding(
        input_ids, *, num_positions: int, embedding_dim: int,
        padding_idx: int, past_key_values_length: int = 0):
    """Functional equivalent of the PyTorch module's forward()."""
    # NOTE: padding_idx / past_key_values_length must be static Python ints.
    past_kv = int(past_key_values_length)
    bsz, seq_len = input_ids.shape
    input_ids = input_ids.astype(jnp.int32)

    # ---- sequence tile K: biggest block that keeps slabs / one-hots small ----
    cap = 512 if embedding_dim <= 256 else 256
    if seq_len <= cap:
        tile_s = seq_len                 # block == full dim: always legal
        num_tiles = 1
    else:
        tile_s = cap                     # multiple of (8, 128)
        num_tiles = pl.cdiv(seq_len, tile_s)
    s_pad = num_tiles * tile_s

    # ---- position ids (plain JAX; trivial int math) --------------------------
    mask = (input_ids != padding_idx).astype(jnp.int32)
    cum = jnp.cumsum(mask, axis=1)                      # (B, S)
    local_pos = cum * mask                              # window row id in [0, S]

    # Per-tile slab base block: every row reachable in tile j lies in
    # [cum[:, j*K], cum[:, j*K] + K - 1] -> covered by window blocks
    # {base, base + 1} with base = cum[:, j*K] // K.
    base = (cum[:, ::tile_s] // tile_s).astype(jnp.int32)         # (B, S_tiles)
    rel = local_pos - jnp.repeat(base * tile_s, tile_s, axis=1)[:, :seq_len]
    rel = jnp.pad(rel, ((0, 0), (0, s_pad - seq_len)))            # pad rows masked on store
    rel3 = rel[:, :, None].astype(jnp.int32)                      # (B, S_pad, 1)
    base_flat = base.reshape(-1)                                  # (B*S_tiles,)

    # ---- windowed sinusoid table (host-built, cached) -------------------------
    num_blocks = seq_len // tile_s + 2          # base + 1 is always a valid block
    win = _window_blocks(num_positions, seq_len, embedding_dim, padding_idx,
                         past_kv, tile_s, num_blocks)

    # ---- VMEM budget from actual block sizes (clamped for v7x's 64 MiB) ------
    blk_bytes = tile_s * embedding_dim * 4
    pipeline_bytes = 2 * (2 * blk_bytes + blk_bytes + tile_s * 4)   # dbl-buffered
    scratch_bytes = 4 * (2 * tile_s * tile_s + 2 * tile_s * embedding_dim)
    vmem_limit = int(min(max(pipeline_bytes + scratch_bytes + (8 << 20),
                             32 << 20), 64 << 20))

    grid_spec = pltpu.PrefetchScalarGridSpec(
        num_scalar_prefetch=1,
        grid=(bsz, num_tiles),
        in_specs=[
            # slab-relative position ids for this tile
            pl.BlockSpec((1, tile_s, 1),
                         lambda b, j, base_ref: (b, j, 0)),
            # low / high slab blocks of the window, driven by scalar prefetch
            pl.BlockSpec((1, tile_s, embedding_dim),
                         lambda b, j, base_ref: (base_ref[b * num_tiles + j], 0, 0)),
            pl.BlockSpec((1, tile_s, embedding_dim),
                         lambda b, j, base_ref: (base_ref[b * num_tiles + j] + 1, 0, 0)),
        ],
        out_specs=pl.BlockSpec((1, tile_s, embedding_dim),
                               lambda b, j, base_ref: (b, j, 0)),
    )

    return pl.pallas_call(
        _slab_gather_kernel,
        out_shape=jax.ShapeDtypeStruct((bsz, seq_len, embedding_dim), jnp.float32),
        grid_spec=grid_spec,
        compiler_params=pltpu.CompilerParams(
            dimension_semantics=("parallel", "parallel"),
            vmem_limit_bytes=vmem_limit,
        ),
    )(base_flat, rel3, win, win)


def _reference(input_ids, *, num_positions, embedding_dim, padding_idx,
               past_key_values_length=0):
    """Pure-JAX reference mirroring the PyTorch module, for verification."""
    bsz, seq_len = input_ids.shape
    num_emb = _table_rows(num_positions, seq_len, padding_idx,
                          int(past_key_values_length))
    weights = jnp.asarray(_sinusoid_table(num_emb, embedding_dim, padding_idx))
    mask = (input_ids != padding_idx).astype(jnp.int32)
    incremental = (jnp.cumsum(mask, axis=1) + past_key_values_length) * mask
    position_ids = incremental + padding_idx
    return weights[position_ids.reshape(-1)].reshape(bsz, seq_len, -1)


if __name__ == "__main__":
    # small, module-consistent shapes
    B, S = 2, 8
    num_positions = 64
    embedding_dim = 32
    padding_idx = 1
    past_key_values_length = 0

    key = jax.random.PRNGKey(0)
    # token ids in [0, 10); id == padding_idx (=1) acts as padding
    input_ids = jax.random.randint(key, (B, S), 0, 10, dtype=jnp.int32)
    # force a couple of explicit padding tokens
    input_ids = input_ids.at[0, -2:].set(padding_idx)
    input_ids = input_ids.at[1, -1:].set(padding_idx)

    out = speech2text_sinusoidal_positional_embedding(
        input_ids,
        num_positions=num_positions,
        embedding_dim=embedding_dim,
        padding_idx=padding_idx,
        past_key_values_length=past_key_values_length,
    )
    out = jax.block_until_ready(out)

    ref = _reference(
        input_ids,
        num_positions=num_positions,
        embedding_dim=embedding_dim,
        padding_idx=padding_idx,
        past_key_values_length=past_key_values_length,
    )
    np.testing.assert_allclose(np.asarray(out), np.asarray(ref),
                               rtol=1e-5, atol=1e-5)

    print("KERNEL_OK")
</pallas_src>

<mosaic_0001>
module attributes {stable_mosaic.version = 11 : i64} {
  func.func @_slab_gather_kernel(%arg0: i32, %arg1: i32, %arg2: memref<2xi32, #tpu.memory_space<smem>>, %arg3: memref<1x8x1xi32, #tpu.memory_space<vmem>>, %arg4: memref<1x8x32xf32, #tpu.memory_space<vmem>>, %arg5: memref<1x8x32xf32, #tpu.memory_space<vmem>>, %arg6: memref<1x8x32xf32, #tpu.memory_space<vmem>>) attributes {dimension_semantics = [#tpu.dimension_semantics<parallel>, #tpu.dimension_semantics<parallel>], iteration_bounds = array<i64: 2, 1>, scalar_prefetch = 1 : i64, scratch_operands = 0 : i64, tpu.core_type = #tpu.core_type<tc>, window_params = [{transform_indices = @transform_0, window_bounds = array<i64: 1, 8, 1>}, {transform_indices = @transform_1, window_bounds = array<i64: 1, 8, 32>}, {transform_indices = @transform_2, window_bounds = array<i64: 1, 8, 32>}, {transform_indices = @transform_3, window_bounds = array<i64: 1, 8, 32>}]} {
    %c0 = arith.constant 0 : index
    %c0_0 = arith.constant 0 : index
    %c0_1 = arith.constant 0 : index
    %0 = vector.load %arg3[%c0, %c0_0, %c0_1] : memref<1x8x1xi32, #tpu.memory_space<vmem>>, vector<1x8x1xi32>
    %1 = vector.shape_cast %0 : vector<1x8x1xi32> to vector<8x1xi32>
    %2 = tpu.iota {dimensions = array<i32: 1>} : vector<8x8xi32>
    %3 = vector.broadcast %1 : vector<8x1xi32> to vector<8x8xi32>
    %4 = arith.cmpi eq, %2, %3 : vector<8x8xi32>
    %5 = arith.extui %4 : vector<8x8xi1> to vector<8x8xi32>
    %6 = arith.sitofp %5 : vector<8x8xi32> to vector<8x8xf32>
    %c8_i32 = arith.constant 8 : i32
    %7 = vector.broadcast %c8_i32 : i32 to vector<8x1xi32>
    %8 = arith.subi %1, %7 : vector<8x1xi32>
    %9 = vector.broadcast %8 : vector<8x1xi32> to vector<8x8xi32>
    %10 = arith.cmpi eq, %2, %9 : vector<8x8xi32>
    %11 = arith.extui %10 : vector<8x8xi1> to vector<8x8xi32>
    %12 = arith.sitofp %11 : vector<8x8xi32> to vector<8x8xf32>
    %c0_2 = arith.constant 0 : index
    %c0_3 = arith.constant 0 : index
    %c0_4 = arith.constant 0 : index
    %13 = vector.load %arg4[%c0_2, %c0_3, %c0_4] : memref<1x8x32xf32, #tpu.memory_space<vmem>>, vector<1x8x32xf32>
    %14 = vector.shape_cast %13 : vector<1x8x32xf32> to vector<8x32xf32>
    %cst = arith.constant dense<0.000000e+00> : vector<8x32xf32>
    %15 = tpu.matmul %6, %14, %cst {dimension_numbers = #tpu.dot_dimension_numbers<[1], [0], [0], [1], [0, 0, 1, 1], [], []>} : vector<8x8xf32>, vector<8x32xf32>, vector<8x32xf32> -> vector<8x32xf32>
    %c0_5 = arith.constant 0 : index
    %c0_6 = arith.constant 0 : index
    %c0_7 = arith.constant 0 : index
    %16 = vector.load %arg5[%c0_5, %c0_6, %c0_7] : memref<1x8x32xf32, #tpu.memory_space<vmem>>, vector<1x8x32xf32>
    %17 = vector.shape_cast %16 : vector<1x8x32xf32> to vector<8x32xf32>
    %cst_8 = arith.constant dense<0.000000e+00> : vector<8x32xf32>
    %18 = tpu.matmul %12, %17, %cst_8 {dimension_numbers = #tpu.dot_dimension_numbers<[1], [0], [0], [1], [0, 0, 1, 1], [], []>} : vector<8x8xf32>, vector<8x32xf32>, vector<8x32xf32> -> vector<8x32xf32>
    %19 = arith.addf %15, %18 : vector<8x32xf32>
    %c0_9 = arith.constant 0 : index
    %c0_10 = arith.constant 0 : index
    %c0_11 = arith.constant 0 : index
    %20 = vector.load %arg6[%c0_9, %c0_10, %c0_11] : memref<1x8x32xf32, #tpu.memory_space<vmem>>, vector<1x8x32xf32>
    %21 = vector.shape_cast %20 : vector<1x8x32xf32> to vector<8x32xf32>
    %22 = vector.shape_cast %19 : vector<8x32xf32> to vector<1x8x32xf32>
    tpu.vector_store %arg6[%c0_9, %c0_10, %c0_11], %22 {strides = array<i32>} : memref<1x8x32xf32, #tpu.memory_space<vmem>>, vector<1x8x32xf32>,
    return
  }
  func.func @transform_0(%arg0: i32, %arg1: i32, %arg2: memref<2xi32, #tpu.memory_space<smem>>) -> (i32, i32, i32) {
    %c0_i32 = arith.constant 0 : i32
    %c0_i32_0 = arith.constant 0 : i32
    return %arg0, %arg1, %c0_i32 : i32, i32, i32
  }
  func.func @transform_1(%arg0: i32, %arg1: i32, %arg2: memref<2xi32, #tpu.memory_space<smem>>) -> (i32, i32, i32) {
    %c1_i32 = arith.constant 1 : i32
    %0 = arith.muli %arg0, %c1_i32 : i32
    %1 = arith.addi %0, %arg1 : i32
    %2 = arith.index_cast %1 : i32 to index
    %3 = memref.load %arg2[%2] : memref<2xi32, #tpu.memory_space<smem>>
    %c0_i32 = arith.constant 0 : i32
    %c0_i32_0 = arith.constant 0 : i32
    %c0_i32_1 = arith.constant 0 : i32
    return %3, %c0_i32, %c0_i32_0 : i32, i32, i32
  }
  func.func @transform_2(%arg0: i32, %arg1: i32, %arg2: memref<2xi32, #tpu.memory_space<smem>>) -> (i32, i32, i32) {
    %c1_i32 = arith.constant 1 : i32
    %0 = arith.muli %arg0, %c1_i32 : i32
    %1 = arith.addi %0, %arg1 : i32
    %2 = arith.index_cast %1 : i32 to index
    %3 = memref.load %arg2[%2] : memref<2xi32, #tpu.memory_space<smem>>
    %c1_i32_0 = arith.constant 1 : i32
    %4 = arith.addi %3, %c1_i32_0 : i32
    %c0_i32 = arith.constant 0 : i32
    %c0_i32_1 = arith.constant 0 : i32
    %c0_i32_2 = arith.constant 0 : i32
    return %4, %c0_i32, %c0_i32_1 : i32, i32, i32
  }
  func.func @transform_3(%arg0: i32, %arg1: i32, %arg2: memref<2xi32, #tpu.memory_space<smem>>) -> (i32, i32, i32) {
    %c0_i32 = arith.constant 0 : i32
    %c0_i32_0 = arith.constant 0 : i32
    return %arg0, %arg1, %c0_i32 : i32, i32, i32
  }
}

</mosaic_0001>

<llo_original>
// kernel: tpu_custom_call.1
$region0: #{tpu_custom_call.1}
  #allocation0 [shape = 'u32[]', space=smem, size = 0x4, offset = 0x4, fixed_abs, tag = 'smem constant byte address 0x4 - core index']
  #allocation1 [shape = 'u32[144,128]{1,0:T(1,128)}', space=vmem, size = 0x12000, scoped, tag = 'internal scratch']
  #allocation2 [shape = 's32[1]{0}', space=sflag, size = 0x4, scoped, tag = 'scoped memory for tpu_custom_call.1']
  #allocation3 [shape = 'u8[512]{0}', space=smem, size = 0x200, scoped, tag = 'prefetched SMEM operand 0']
  %s0 = inlined_call_operand.vmem [shape: s32[2], index: 0, kind: input, shape index: {}]
  %s1 = inlined_call_operand.vmem [shape: s32[2,8,1], index: 1, kind: input, shape index: {}]
  %s2 = inlined_call_operand.hbm [shape: f32[3,8,32], index: 2, kind: input, shape index: {}]
  %s3 = inlined_call_operand.hbm [shape: f32[3,8,32], index: 3, kind: input, shape index: {}]
  %s4 = inlined_call_operand.hbm [shape: f32[2,8,32], index: 4, kind: output, shape index: {}]
  %s5 = sld [smem:[#allocation0]]
  $region53: #{tpu_custom_call.1} parent=0
    _
  %s7 = ssub.s32 1, %s5
  %s8 = scalar_select 0, %s7, %s5
  %s9 = sshll.u32 %s0, 4
  %s10 = int_to_ptr.vmem [resolvable:$true] %s9
  %12 = dma.vmem_to_smem %s10, 16, [#allocation3], [#allocation2]
  %13 = dma.done [#allocation2], 16
  %14 = sfence
  $region1: #{tpu_custom_call.1} parent=0
    #allocation4 [shape = 'u8[8192]{0}', space=vmem, size = 0x2000, scoped, tag = 'input window, operand 2']
    #allocation5 [shape = 's32[2]{0}', space=sflag, size = 0x8, scoped, tag = 'scoped memory for tpu_custom_call.1']
    #allocation6 [shape = 's32[2]{0}', space=sflag, size = 0x8, scoped, tag = 'scoped memory for tpu_custom_call.1']
    #allocation7 [shape = 'u8[8192]{0}', space=vmem, size = 0x2000, scoped, tag = 'input window, operand 3']
    #allocation8 [shape = 's32[2]{0}', space=sflag, size = 0x8, scoped, tag = 'scoped memory for tpu_custom_call.1']
    #allocation9 [shape = 'u8[8192]{0}', space=vmem, size = 0x2000, scoped, tag = 'output window, operand 0']
    %15 = vsyncpa [#allocation5], 0
    %s16 = scalar_lea.sflag [#allocation5], 1
    %17 = vsyncpa %s16, 0
    %18 = vsyncpa [#allocation8], 0
    %s19 = scalar_lea.sflag [#allocation8], 1
    %20 = vsyncpa %s19, 0
    %21 = vsyncpa [#allocation6], 0
    %s22 = scalar_lea.sflag [#allocation6], 1
    %23 = vsyncpa %s22, 0
    loop: start=0, step=1, limit=4
    $region2: #{tpu_custom_call.1} parent=1 // loop_pre_header
      _
    $region3: #{tpu_custom_call.1} parent=1 // loop_header
      %s25 = sphi 0, %s29
      %p26 = scmp.ge.s32.totalorder %s25, 4
      %s32 = sphi 0, %s44
      %s33 = sphi 0, %s40
      %s34 = sphi 0, %s32
      %s35 = sphi 0, %s33
      %s36 = sphi 0, %s34
      %s37 = sphi 0, %s35
      %s49 = sphi 0, %s51
      %s52 = sphi 0, %s49
      %s53 = sphi 0, %s52
      %s69 = sphi 0, %s53
      %s79 = sphi 0, %s81
      %s82 = sphi 0, %s79
      %s83 = sphi 0, %s82
      %s99 = sphi 0, %s83
      %s111 = sphi 0, %s113
      %s114 = sphi 0, %s111
      %s115 = sphi 0, %s114
      %s131 = sphi 0, %s115
      %s139 = sphi 0, %s141
      %s142 = sphi 0, %s139
      %s143 = sphi 0, %s142
      %s159 = sphi 0, %s143
    $region4: #{tpu_custom_call.1} parent=1 // loop_header_branch
      %28 = sbr.rel (%p26) target = $region8
    $region5: #{tpu_custom_call.1} parent=1 // loop_body
      %s30 = ssub.s32 %s25, 1
      %s31 = ssub.s32 %s25, 2
      %s38 = sadd.s32 1, %s33
      %p39 = scmp.ge.s32.totalorder %s38, 1
      %s40 = scalar_select %p39, 0, %s38
      %s41 = sadd.s32 1, %s32
      %s42 = scalar_select %p39, %s41, %s32
      %p43 = scmp.ge.s32.totalorder %s42, 2
      %s44 = scalar_select %p43, 0, %s42
      %s45 = ssub.s32 %s32, %s44
      %s46 = ssub.s32 %s33, %s40
      %s47 = sor.u32 %s45, %s46
      %p48 = scmp.eq.s32.totalorder %s47, 0
      %s50 = sadd.s32 %s49, 1
      %s51 = scalar_select %p48, %s49, %s50
      %p54 = pneg %p48
      %p55 = scmp.eq.s32.totalorder %s25, 1
      %p56 = por %p54, %p55
      %p57 = scmp.ne.s32.totalorder %s49, %s52
      %p58 = scmp.eq.s32.totalorder %s25, 0
      %p59 = por %p57, %p58
      %p60 = scmp.ne.s32.totalorder %s49, %s52
      %p61 = scmp.eq.s32.totalorder %s30, 1
      %p62 = por %p60, %p61
      %p63 = scmp.ne.s32.totalorder %s52, %s53
      %p64 = scmp.eq.s32.totalorder %s30, 0
      %p65 = por %p63, %p64
      %p66 = scmp.ne.s32.totalorder %s52, %s53
      %p67 = scmp.eq.s32.totalorder %s31, 1
      %p68 = por %p66, %p67
      %p70 = scmp.ne.s32.totalorder %s53, %s69
      %p71 = scmp.eq.s32.totalorder %s31, 0
      %p72 = por %p70, %p71
      %s73 = sadd.s32 %s32, %s33
      %s74 = sld [smem:[#allocation3 + %s73]]
      %s75 = sadd.s32 %s44, %s40
      %s76 = sld [smem:[#allocation3 + %s75]]
      %s77 = ssub.s32 %s74, %s76
      %p78 = scmp.eq.s32.totalorder %s77, 0
      %s80 = sadd.s32 %s79, 1
      %s81 = scalar_select %p78, %s79, %s80
      %p84 = pneg %p78
      %p85 = scmp.eq.s32.totalorder %s25, 1
      %p86 = por %p84, %p85
      %p87 = scmp.ne.s32.totalorder %s79, %s82
      %p88 = scmp.eq.s32.totalorder %s25, 0
      %p89 = por %p87, %p88
      %p90 = scmp.ne.s32.totalorder %s79, %s82
      %p91 = scmp.eq.s32.totalorder %s30, 1
      %p92 = por %p90, %p91
      %p93 = scmp.ne.s32.totalorder %s82, %s83
      %p94 = scmp.eq.s32.totalorder %s30, 0
      %p95 = por %p93, %p94
      %p96 = scmp.ne.s32.totalorder %s82, %s83
      %p97 = scmp.eq.s32.totalorder %s31, 1
      %p98 = por %p96, %p97
      %p100 = scmp.ne.s32.totalorder %s83, %s99
      %p101 = scmp.eq.s32.totalorder %s31, 0
      %p102 = por %p100, %p101
      %s103 = sadd.s32 %s32, %s33
      %s104 = sld [smem:[#allocation3 + %s103]]
      %s105 = sadd.s32 %s104, 1
      %s106 = sadd.s32 %s44, %s40
      %s107 = sld [smem:[#allocation3 + %s106]]
      %s108 = sadd.s32 %s107, 1
      %s109 = ssub.s32 %s105, %s108
      %p110 = scmp.eq.s32.totalorder %s109, 0
      %s112 = sadd.s32 %s111, 1
      %s113 = scalar_select %p110, %s111, %s112
      %p116 = pneg %p110
      %p117 = scmp.eq.s32.totalorder %s25, 1
      %p118 = por %p116, %p117
      %p119 = scmp.ne.s32.totalorder %s111, %s114
      %p120 = scmp.eq.s32.totalorder %s25, 0
      %p121 = por %p119, %p120
      %p122 = scmp.ne.s32.totalorder %s111, %s114
      %p123 = scmp.eq.s32.totalorder %s30, 1
      %p124 = por %p122, %p123
      %p125 = scmp.ne.s32.totalorder %s114, %s115
      %p126 = scmp.eq.s32.totalorder %s30, 0
      %p127 = por %p125, %p126
      %p128 = scmp.ne.s32.totalorder %s114, %s115
      %p129 = scmp.eq.s32.totalorder %s31, 1
      %p130 = por %p128, %p129
      %p132 = scmp.ne.s32.totalorder %s115, %s131
      %p133 = scmp.eq.s32.totalorder %s31, 0
      %p134 = por %p132, %p133
      %s135 = ssub.s32 %s32, %s44
      %s136 = ssub.s32 %s33, %s40
      %s137 = sor.u32 %s135, %s136
      %p138 = scmp.eq.s32.totalorder %s137, 0
      %s140 = sadd.s32 %s139, 1
      %s141 = scalar_select %p138, %s139, %s140
      %p144 = pneg %p138
      %p145 = scmp.eq.s32.totalorder %s25, 1
      %p146 = por %p144, %p145
      %p147 = scmp.ne.s32.totalorder %s139, %s142
      %p148 = scmp.eq.s32.totalorder %s25, 0
      %p149 = por %p147, %p148
      %p150 = scmp.ne.s32.totalorder %s139, %s142
      %p151 = scmp.eq.s32.totalorder %s30, 1
      %p152 = por %p150, %p151
      %p153 = scmp.ne.s32.totalorder %s142, %s143
      %p154 = scmp.eq.s32.totalorder %s30, 0
      %p155 = por %p153, %p154
      %p156 = scmp.ne.s32.totalorder %s142, %s143
      %p157 = scmp.eq.s32.totalorder %s31, 1
      %p158 = por %p156, %p157
      %p160 = scmp.ne.s32.totalorder %s143, %s159
      %p161 = scmp.eq.s32.totalorder %s31, 0
      %p162 = por %p160, %p161
      %p163 = scmp.le.s32.totalorder 1, %s25
      %p164 = scmp.lt.s32.totalorder %s25, 3
      %p165 = pnand %p163, %p164
      %p166 = pneg %p165
      // Predicated region
      $region9: #{tpu_custom_call.1} parent=5 // pred_check
        _
      $region10: #{tpu_custom_call.1} parent=5 // pred_check_branch
        %168 = sbr.rel (%p165) target = $region12
      $region11: #{tpu_custom_call.1} parent=5 // pred_region
        %s169 = ssub.s32 %s25, 1
      $region12: #{tpu_custom_call.1} parent=5 // pred_fallthru
        _
      %p170 = scmp.lt.s32.totalorder %s25, 2
      // Predicated region
      $region13: #{tpu_custom_call.1} parent=5 // pred_check
        %p171 = pneg %p170
      $region14: #{tpu_custom_call.1} parent=5 // pred_check_branch
        %173 = sbr.rel (%p171) target = $region16
      $region15: #{tpu_custom_call.1} parent=5 // pred_region
        // Predicated region
        $region17: #{tpu_custom_call.1} parent=15 // pred_check
          %p174 = pneg %p59
        $region18: #{tpu_custom_call.1} parent=15 // pred_check_branch
          %176 = sbr.rel (%p174) target = $region20
        $region19: #{tpu_custom_call.1} parent=15 // pred_region
          %p177 = scmp.lt.s32.totalorder %s32, 1
          %s178 = scalar_select %p177, %s32, 1
          %p179 = scmp.lt.s32.totalorder %s33, 0
          %s180 = scalar_select %p179, %s33, 0
          %s181 = sadd.s32 %s180, %s178
          %s182 = smul.addr %s181, 8
          %s183 = scalar_lea.vmem %s1, %s182
        $region20: #{tpu_custom_call.1} parent=15 // pred_fallthru
          _
        // Predicated region
        $region21: #{tpu_custom_call.1} parent=15 // pred_check
          %p184 = pneg %p89
        $region22: #{tpu_custom_call.1} parent=15 // pred_check_branch
          %186 = sbr.rel (%p184) target = $region24
        $region23: #{tpu_custom_call.1} parent=15 // pred_region
          %s187 = sand.u32 %s79, 1
          %s188 = scalar_lea.sflag [#allocation5], %s187
          %s189 = sand.u32 %s79, 1
          %s190 = smul.addr %s189, 8
          %s191 = scalar_lea.vmem [#allocation4], %s190
          %s192 = sadd.s32 %s32, %s33
          %s193 = sld [smem:[#allocation3 + %s192]]
          %s195 = ssub.s32 128, 128
          %196 = vsyncadd %s188, %s195
          %s197 = smul.addr %s193, 128
          %s198 = scalar_lea.hbm %s2, %s197
          %s200 = sshll.u32 %s191, 4
          %s201 = int_to_ptr.vmem [resolvable:$true] %s200
          %203 = dma.hbm_to_vmem [thread:$0]  %s198, 128, %s201, %s188
        $region24: #{tpu_custom_call.1} parent=15 // pred_fallthru
          _
        // Predicated region
        $region25: #{tpu_custom_call.1} parent=15 // pred_check
          %p204 = pneg %p121
        $region26: #{tpu_custom_call.1} parent=15 // pred_check_branch
          %206 = sbr.rel (%p204) target = $region28
        $region27: #{tpu_custom_call.1} parent=15 // pred_region
          %s207 = sand.u32 %s111, 1
          %s208 = scalar_lea.sflag [#allocation8], %s207
          %s209 = sand.u32 %s111, 1
          %s210 = smul.addr %s209, 8
          %s211 = scalar_lea.vmem [#allocation7], %s210
          %s212 = sadd.s32 %s32, %s33
          %s213 = sld [smem:[#allocation3 + %s212]]
          %s214 = sadd.s32 %s213, 1
          %s216 = ssub.s32 128, 128
          %217 = vsyncadd %s208, %s216
          %s218 = smul.addr %s214, 128
          %s219 = scalar_lea.hbm %s3, %s218
          %s221 = sshll.u32 %s211, 4
          %s222 = int_to_ptr.vmem [resolvable:$true] %s221
          %224 = dma.hbm_to_vmem [thread:$0]  %s219, 128, %s222, %s208
        $region28: #{tpu_custom_call.1} parent=15 // pred_fallthru
          _
      $region16: #{tpu_custom_call.1} parent=5 // pred_fallthru
        _
      %p225 = scmp.le.s32.totalorder 1, %s25
      %p226 = scmp.lt.s32.totalorder %s25, 3
      %p227 = pnand %p225, %p226
      %p228 = pneg %p227
      // Predicated region
      $region29: #{tpu_custom_call.1} parent=5 // pred_check
        _
      $region30: #{tpu_custom_call.1} parent=5 // pred_check_branch
        %230 = sbr.rel (%p227) target = $region32
      $region31: #{tpu_custom_call.1} parent=5 // pred_region
        %s231 = ssub.s32 %s25, 1
        %s232 = sand.u32 %s82, 1
        %s233 = scalar_lea.sflag [#allocation5], %s232
        %s234 = sand.u32 %s82, 1
        %s235 = smul.addr %s234, 8
        %s236 = scalar_lea.vmem [#allocation4], %s235
        // Predicated region
        $region33: #{tpu_custom_call.1} parent=31 // pred_check
          %p237 = pneg %p95
        $region34: #{tpu_custom_call.1} parent=31 // pred_check_branch
          %239 = sbr.rel (%p237) target = $region36
        $region35: #{tpu_custom_call.1} parent=31 // pred_region
          %240 = dma.done %s233, 128
        $region36: #{tpu_custom_call.1} parent=31 // pred_fallthru
          _
        %s241 = sand.u32 %s114, 1
        %s242 = scalar_lea.sflag [#allocation8], %s241
        %s243 = sand.u32 %s114, 1
        %s244 = smul.addr %s243, 8
        %s245 = scalar_lea.vmem [#allocation7], %s244
        // Predicated region
        $region37: #{tpu_custom_call.1} parent=31 // pred_check
          %p246 = pneg %p127
        $region38: #{tpu_custom_call.1} parent=31 // pred_check_branch
          %248 = sbr.rel (%p246) target = $region40
        $region39: #{tpu_custom_call.1} parent=31 // pred_region
          %249 = dma.done %s242, 128
        $region40: #{tpu_custom_call.1} parent=31 // pred_fallthru
          _
        %p250 = scmp.lt.s32.totalorder %s34, 1
        %s251 = scalar_select %p250, %s34, 1
        %p252 = scmp.lt.s32.totalorder %s35, 0
        %s253 = scalar_select %p252, %s35, 0
        %s254 = sadd.s32 %s253, %s251
        %s255 = smul.addr %s254, 8
        %s256 = scalar_lea.vmem %s1, %s255
        %p257 = pneg %p65
        %p258 = pneg %p62
        %s259 = sand.u32 %s82, 1
        %s260 = scalar_lea.sflag [#allocation5], %s259
        %s261 = sand.u32 %s82, 1
        %s262 = smul.addr %s261, 8
        %s263 = scalar_lea.vmem [#allocation4], %s262
        %p264 = pneg %p95
        %p265 = pneg %p92
        %s266 = sand.u32 %s114, 1
        %s267 = scalar_lea.sflag [#allocation8], %s266
        %s268 = sand.u32 %s114, 1
        %s269 = smul.addr %s268, 8
        %s270 = scalar_lea.vmem [#allocation7], %s269
        %p271 = pneg %p127
        %p272 = pneg %p124
        %p273 = pneg %p155
        %p274 = pneg %p152
        %s275 = sand.u32 %s142, 1
        %s276 = scalar_lea.sflag [#allocation6], %s275
        %s277 = sand.u32 %s142, 1
        %s278 = smul.addr %s277, 8
        %s279 = scalar_lea.vmem [#allocation9], %s278
        %p280 = scmp.lt.s32.totalorder %s34, 1
        %s281 = scalar_select %p280, %s34, 1
        %p282 = scmp.lt.s32.totalorder %s35, 0
        %s283 = scalar_select %p282, %s35, 0
        %s284 = sadd.s32 %s283, %s281
        %s285 = smul.addr %s284, 8
        %s286 = scalar_lea.vmem %s1, %s285
        %s287 = sadd.s32 %s34, %s35
        %s288 = sld [smem:[#allocation3 + %s287]]
        %s289 = sadd.s32 %s34, %s35
        %s290 = sld [smem:[#allocation3 + %s289]]
        %s291 = sadd.s32 %s290, 1
        %v292 = vld [vmem:[%s286] sm:$0xff]
        %v293 = vlaneseq
        %v294 = vand.u32 %v293, 127
        %295 = vset.pattern.permute.xlu0 0
        %296 = vperm.xlu0 %295, %v292
        %v297 = vpop.permute.xlu0 %296
        %vm298 = vcmp.eq.s32.totalorder %v294, %v297
        %v299 = vsel %vm298, 1, 0
        %v300 = vcvt.s32.f32 %v299
        %v301 = vsub.s32 %v292, 8
        %302 = vset.pattern.permute.xlu0 0
        %303 = vperm.xlu0 %302, %v301
        %v304 = vpop.permute.xlu0 %303
        %vm305 = vcmp.eq.s32.totalorder %v294, %v304
        %v306 = vsel %vm305, 1, 0
        %v307 = vcvt.s32.f32 %v306
        %v308 = vld [vmem:[%s236] sm:$0xff]
        %v309 = vld [vmem:[%s245] sm:$0xff]
        %vm310 = vcmask 64512
        %v312 = vsel %vm310, %v307, 0
        %314 = vmatprep.subr.mxu0 0.0
        %315 = vmatpush1.msra.mxu0 0.0
        %316 = vmatprep.subr.mxu0 0.0
        %317 = vmatpush1.msra.mxu0 0.0
        %318 = vmatprep.subr.mxu0 0.0
        %319 = vmatpush1.msra.mxu0 0.0
        %320 = vmatprep.subr.mxu0 0.0
        %321 = vmatpush1.msra.mxu0 0.0
        %322 = vmatprep.subr.mxu0 0.0
        %323 = vmatpush1.msra.mxu0 0.0
        %324 = vmatprep.subr.mxu0 0.0
        %325 = vmatpush1.msra.mxu0 0.0
        %326 = vmatprep.subr.mxu0 0.0
        %327 = vmatpush1.msra.mxu0 0.0
        %328 = vmatprep.subr.mxu0 0.0
        %329 = vmatpush1.msra.mxu0 0.0
        %330 = vmatprep.subr.mxu0 0.0
        %331 = vmatpush1.msra.mxu0 0.0
        %332 = vmatprep.subr.mxu0 0.0
        %333 = vmatpush1.msra.mxu0 0.0
        %334 = vmatprep.subr.mxu0 0.0
        %335 = vmatpush1.msra.mxu0 0.0
        %336 = vmatprep.subr.mxu0 0.0
        %337 = vmatpush1.msra.mxu0 0.0
        %338 = vmatprep.subr.mxu0 0.0
        %339 = vmatpush1.msra.mxu0 0.0
        %340 = vmatprep.subr.mxu0 0.0
        %341 = vmatpush1.msra.mxu0 0.0
        %342 = vmatprep.subr.mxu0 0.0
        %343 = vmatpush1.msra.mxu0 0.0
        %344 = vmatprep.subr.mxu0 0.0
        %345 = vmatpush1.msra.mxu0 %v309
        %346 = vmatprep.subr.mxu0 0.0
        %347 = vmatpush2.msra.mxu0 0.0
        %348 = vmatprep.subr.mxu0 0.0
        %349 = vmatpush2.msra.mxu0 0.0
        %350 = vmatprep.subr.mxu0 0.0
        %351 = vmatpush2.msra.mxu0 0.0
        %352 = vmatprep.subr.mxu0 0.0
        %353 = vmatpush2.msra.mxu0 0.0
        %354 = vmatprep.subr.mxu0 0.0
        %355 = vmatpush2.msra.mxu0 0.0
        %356 = vmatprep.subr.mxu0 0.0
        %357 = vmatpush2.msra.mxu0 0.0
        %358 = vmatprep.subr.mxu0 0.0
        %359 = vmatpush2.msra.mxu0 0.0
        %360 = vmatprep.subr.mxu0 0.0
        %361 = vmatpush2.msra.mxu0 0.0
        %362 = vmatprep.subr.mxu0 0.0
        %363 = vmatpush2.msra.mxu0 0.0
        %364 = vmatprep.subr.mxu0 0.0
        %365 = vmatpush2.msra.mxu0 0.0
        %366 = vmatprep.subr.mxu0 0.0
        %367 = vmatpush2.msra.mxu0 0.0
        %368 = vmatprep.subr.mxu0 0.0
        %369 = vmatpush2.msra.mxu0 0.0
        %370 = vmatprep.subr.mxu0 0.0
        %371 = vmatpush2.msra.mxu0 0.0
        %372 = vmatprep.subr.mxu0 0.0
        %373 = vmatpush2.msra.mxu0 0.0
        %374 = vmatprep.subr.mxu0 0.0
        %375 = vmatpush2.msra.mxu0 0.0
        %376 = vmatprep.subr.mxu0 0.0
        %377 = vmatpush2.msra.mxu0 0.0
        %378 = vmatprep.mubr.f32.mxu0 0.0
        %379 = vmatmul.mubr.f32.gmra.mxu0 %v312
        %v380 = vpop.f32.mrf.mxu0
        %v381 = vadd.f32 0.0, %v380
        %v382 = vpop.f32.mrf.mxu0
        %383 = vdwg.mxu0
        %v385 = vsel %vm310, %v300, 0
        %387 = vmatprep.subr.mxu0 0.0
        %388 = vmatpush1.msra.mxu0 0.0
        %389 = vmatprep.subr.mxu0 0.0
        %390 = vmatpush1.msra.mxu0 0.0
        %391 = vmatprep.subr.mxu0 0.0
        %392 = vmatpush1.msra.mxu0 0.0
        %393 = vmatprep.subr.mxu0 0.0
        %394 = vmatpush1.msra.mxu0 0.0
        %395 = vmatprep.subr.mxu0 0.0
        %396 = vmatpush1.msra.mxu0 0.0
        %397 = vmatprep.subr.mxu0 0.0
        %398 = vmatpush1.msra.mxu0 0.0
        %399 = vmatprep.subr.mxu0 0.0
        %400 = vmatpush1.msra.mxu0 0.0
        %401 = vmatprep.subr.mxu0 0.0
        %402 = vmatpush1.msra.mxu0 0.0
        %403 = vmatprep.subr.mxu0 0.0
        %404 = vmatpush1.msra.mxu0 0.0
        %405 = vmatprep.subr.mxu0 0.0
        %406 = vmatpush1.msra.mxu0 0.0
        %407 = vmatprep.subr.mxu0 0.0
        %408 = vmatpush1.msra.mxu0 0.0
        %409 = vmatprep.subr.mxu0 0.0
        %410 = vmatpush1.msra.mxu0 0.0
        %411 = vmatprep.subr.mxu0 0.0
        %412 = vmatpush1.msra.mxu0 0.0
        %413 = vmatprep.subr.mxu0 0.0
        %414 = vmatpush1.msra.mxu0 0.0
        %415 = vmatprep.subr.mxu0 0.0
        %416 = vmatpush1.msra.mxu0 0.0
        %417 = vmatprep.subr.mxu0 0.0
        %418 = vmatpush1.msra.mxu0 %v308
        %419 = vmatprep.subr.mxu0 0.0
        %420 = vmatpush2.msra.mxu0 0.0
        %421 = vmatprep.subr.mxu0 0.0
        %422 = vmatpush2.msra.mxu0 0.0
        %423 = vmatprep.subr.mxu0 0.0
        %424 = vmatpush2.msra.mxu0 0.0
        %425 = vmatprep.subr.mxu0 0.0
        %426 = vmatpush2.msra.mxu0 0.0
        %427 = vmatprep.subr.mxu0 0.0
        %428 = vmatpush2.msra.mxu0 0.0
        %429 = vmatprep.subr.mxu0 0.0
        %430 = vmatpush2.msra.mxu0 0.0
        %431 = vmatprep.subr.mxu0 0.0
        %432 = vmatpush2.msra.mxu0 0.0
        %433 = vmatprep.subr.mxu0 0.0
        %434 = vmatpush2.msra.mxu0 0.0
        %435 = vmatprep.subr.mxu0 0.0
        %436 = vmatpush2.msra.mxu0 0.0
        %437 = vmatprep.subr.mxu0 0.0
        %438 = vmatpush2.msra.mxu0 0.0
        %439 = vmatprep.subr.mxu0 0.0
        %440 = vmatpush2.msra.mxu0 0.0
        %441 = vmatprep.subr.mxu0 0.0
        %442 = vmatpush2.msra.mxu0 0.0
        %443 = vmatprep.subr.mxu0 0.0
        %444 = vmatpush2.msra.mxu0 0.0
        %445 = vmatprep.subr.mxu0 0.0
        %446 = vmatpush2.msra.mxu0 0.0
        %447 = vmatprep.subr.mxu0 0.0
        %448 = vmatpush2.msra.mxu0 0.0
        %449 = vmatprep.subr.mxu0 0.0
        %450 = vmatpush2.msra.mxu0 0.0
        %451 = vmatprep.mubr.f32.mxu0 0.0
        %452 = vmatmul.mubr.f32.gmra.mxu0 %v385
        %v453 = vpop.f32.mrf.mxu0
        %v454 = vadd.f32 %v381, %v453
        %v455 = vpop.f32.mrf.mxu0
        %456 = vdwg.mxu0
        %vm457 = vcmask 261120
        %458 = vst.msk [vmem:[%s279] sm:$0xff] %vm457, %v454
        %s459 = sand.u32 %s142, 1
        %s460 = scalar_lea.sflag [#allocation6], %s459
        %s461 = sand.u32 %s142, 1
        %s462 = smul.addr %s461, 8
        %s463 = scalar_lea.vmem [#allocation9], %s462
        // Predicated region
        $region41: #{tpu_custom_call.1} parent=31 // pred_check
          %p464 = pneg %p152
        $region42: #{tpu_custom_call.1} parent=31 // pred_check_branch
          %466 = sbr.rel (%p464) target = $region44
        $region43: #{tpu_custom_call.1} parent=31 // pred_region
          %s468 = ssub.s32 128, 128
          %469 = vsyncadd %s460, %s468
          %s470 = sadd.s32 %s35, %s34
          %s471 = smul.addr %s470, 128
          %s472 = scalar_lea.hbm %s4, %s471
          %s474 = sshll.u32 %s463, 4
          %s475 = int_to_ptr.vmem [resolvable:$true] %s474
          %477 = dma.vmem_to_hbm [thread:$0]  %s475, 128, %s472, %s460
        $region44: #{tpu_custom_call.1} parent=31 // pred_fallthru
          _
      $region32: #{tpu_custom_call.1} parent=5 // pred_fallthru
        _
      %p478 = scmp.le.s32.totalorder 2, %s25
      // Predicated region
      $region45: #{tpu_custom_call.1} parent=5 // pred_check
        %p479 = pneg %p478
      $region46: #{tpu_custom_call.1} parent=5 // pred_check_branch
        %481 = sbr.rel (%p479) target = $region48
      $region47: #{tpu_custom_call.1} parent=5 // pred_region
        %s482 = ssub.s32 %s25, 2
        // Predicated region
        $region49: #{tpu_custom_call.1} parent=47 // pred_check
          %p483 = pneg %p158
        $region50: #{tpu_custom_call.1} parent=47 // pred_check_branch
          %485 = sbr.rel (%p483) target = $region52
        $region51: #{tpu_custom_call.1} parent=47 // pred_region
          %s486 = sand.u32 %s143, 1
          %s487 = scalar_lea.sflag [#allocation6], %s486
          %s488 = sand.u32 %s143, 1
          %s489 = smul.addr %s488, 8
          %s490 = scalar_lea.vmem [#allocation9], %s489
          %491 = dma.done %s487, 128
        $region52: #{tpu_custom_call.1} parent=47 // pred_fallthru
          _
      $region48: #{tpu_custom_call.1} parent=5 // pred_fallthru
        _
    $region6: #{tpu_custom_call.1} parent=1 // loop_footer
      %s29 = sadd.s32 1, %s25
    $region7: #{tpu_custom_call.1} parent=1 // loop_footer_branch
      %24 = sbr.rel target = $region3
    $region8: #{tpu_custom_call.1} parent=1 // loop_exit
      _
    %492 = vsyncpa [#allocation5], 1
    %s493 = scalar_lea.sflag [#allocation5], 1
    %494 = vsyncpa %s493, 1
    %495 = vsyncpa [#allocation8], 1
    %s496 = scalar_lea.sflag [#allocation8], 1
    %497 = vsyncpa %s496, 1
    %498 = vsyncpa [#allocation6], 1
    %s499 = scalar_lea.sflag [#allocation6], 1
    %500 = vsyncpa %s499, 1

</llo_original>
